<compile_context>
chip_gen: v5e
topology: v5e:2x2
jax: 0.10.0
libtpu: 0.0.40
codegen_flags: <defaults>
</compile_context>

<pallas_src>
import functools
import math

import jax
import jax.numpy as jnp
from jax import lax
from jax.experimental import pallas as pl
from jax.experimental.pallas import tpu as pltpu

LOG_STD_MAX = 2.0
LOG_STD_MIN = -20.0

_SQRT_2_OVER_PI = math.sqrt(2.0 / math.pi)


def _round_up(n, m):
    return ((n + m - 1) // m) * m


def _gelu_tanh(x):
    # tanh-approx GELU: 0.5*x*(1 + tanh(sqrt(2/pi)*(x + 0.044715*x^3))).
    # tanh lowers to the EUP; only a handful of VALU ops per element remain.
    c = jnp.asarray(_SQRT_2_OVER_PI, x.dtype)
    k = jnp.asarray(0.044715, x.dtype)
    half = jnp.asarray(0.5, x.dtype)
    one = jnp.asarray(1.0, x.dtype)
    return half * x * (one + jnp.tanh(c * (x + k * x * x * x)))


def _default_gelu_dtype():
    """bf16 GELU on bf16-native VALU/EUP chips (v6e/v7x), f32 elsewhere."""
    try:
        kind = jax.devices()[0].device_kind.lower()
    except Exception:
        return jnp.float32
    if any(tag in kind for tag in ("v6", "v7", "7x")):
        return jnp.bfloat16
    return jnp.float32


def _actor_kernel(x_ref, w1_ref, b1_ref, w2_ref, b2_ref, whT_ref, bhT_ref,
                  out_ref, *, act_dim, gelu_dtype):
    cdt = w1_ref.dtype                      # bf16 compute dtype for MXU operands
    x = x_ref[...].astype(cdt)              # (TB, obs_dim)

    # Hoisted bias loads (f32).
    b1 = b1_ref[...]
    b2 = b2_ref[...]
    bhT = bhT_ref[...]                      # (HEAD_ROWS, 1)

    h1 = jnp.dot(x, w1_ref[...], preferred_element_type=jnp.float32) + b1
    h1 = _gelu_tanh(h1.astype(gelu_dtype)).astype(cdt)

    h2 = jnp.dot(h1, w2_ref[...], preferred_element_type=jnp.float32) + b2
    h2 = _gelu_tanh(h2.astype(gelu_dtype)).astype(cdt)

    # Fused, transposed mean|log_std head: (HEAD_ROWS, hidden) x (TB, hidden)^T
    # -> (HEAD_ROWS, TB).  Lane dim = batch tile => lane-dense, tiny writeback.
    headT = jnp.einsum("rh,bh->rb", whT_ref[...], h2,
                       preferred_element_type=jnp.float32) + bhT

    # Rows [act_dim, ...) are log_std (padding rows are all-zero: clamp is a
    # no-op there and they are sliced away by the wrapper).
    row = lax.broadcasted_iota(jnp.int32, (headT.shape[0], 1), 0)
    clamped = jnp.clip(headT, LOG_STD_MIN, LOG_STD_MAX)
    out_ref[...] = jnp.where(row >= act_dim, clamped, headT).astype(out_ref.dtype)


def _choose_batch_tile(batch, obs_dim, hidden_dim, head_rows, w_bytes,
                       vmem_budget_bytes=12 << 20, max_tb=1024):
    """Largest batch tile under a v5e-safe VMEM budget, kept lane-aligned
    (multiple of 128 whenever the grid has more than one step) and split into
    >=2 tiles for large batches so both v7x TensorCores get work."""
    b_pad_min = _round_up(batch, 8)

    # Resident weights/biases: Pallas double-buffers even constant-index inputs.
    resident = 2 * (w_bytes * (obs_dim * hidden_dim + hidden_dim * hidden_dim
                               + head_rows * hidden_dim)
                    + 4 * (2 * hidden_dim + head_rows))
    budget = max(vmem_budget_bytes - resident, 1 << 20)

    per_row = (2 * 4 * obs_dim                    # double-buffered x tile (f32)
               + 2 * 4 * head_rows                # double-buffered out tile (f32)
               + 4 * (2 * hidden_dim + head_rows) # f32 h1/h2/headT intermediates
               + 2 * 2 * hidden_dim)              # bf16 copies fed to the MXU
    tb = int(budget // (2 * per_row))             # 2x slack for vregs / temps
    tb = min(tb, max_tb)
    tb = max(128, (tb // 128) * 128)              # lane dim of transposed output

    if tb >= b_pad_min:
        if b_pad_min >= 256:
            # Split so the "parallel" batch axis has >=2 steps (v7x dual-TC).
            tb = max(128, ((b_pad_min // 2) // 128) * 128)
        else:
            tb = b_pad_min                        # single tile == full padded batch
    return tb


def actor_forward(x, params, act_dim, *, gelu_dtype=None,
                  vmem_budget_bytes=12 << 20):
    """x: (B, obs_dim) float32. Returns (mean, log_std), each f32 (B, act_dim)."""
    if gelu_dtype is None:
        gelu_dtype = _default_gelu_dtype()

    B, obs_dim = x.shape
    hidden_dim = params["w1"].shape[1]
    head_rows = params["whT"].shape[0]
    w_bytes = jnp.dtype(params["w1"].dtype).itemsize

    tb = _choose_batch_tile(B, obs_dim, hidden_dim, head_rows, w_bytes,
                            vmem_budget_bytes)
    b_pad = _round_up(B, tb)
    if b_pad != B:
        x = jnp.pad(x, ((0, b_pad - B), (0, 0)))

    const = lambda i: (0, 0)

    out = pl.pallas_call(
        functools.partial(_actor_kernel, act_dim=act_dim, gelu_dtype=gelu_dtype),
        out_shape=jax.ShapeDtypeStruct((head_rows, b_pad), jnp.float32),
        grid=(b_pad // tb,),
        in_specs=[
            pl.BlockSpec((tb, obs_dim), lambda i: (i, 0)),       # streamed x tiles
            pl.BlockSpec((obs_dim, hidden_dim), const),          # resident weights
            pl.BlockSpec((1, hidden_dim), const),
            pl.BlockSpec((hidden_dim, hidden_dim), const),
            pl.BlockSpec((1, hidden_dim), const),
            pl.BlockSpec((head_rows, hidden_dim), const),
            pl.BlockSpec((head_rows, 1), const),
        ],
        out_specs=pl.BlockSpec((head_rows, tb), lambda i: (0, i)),  # lane = batch
        compiler_params=pltpu.CompilerParams(
            dimension_semantics=("parallel",)),
    )(x, params["w1"], params["b1"], params["w2"], params["b2"],
      params["whT"], params["bhT"])

    mean = out[:act_dim, :B].T
    log_std = out[act_dim:2 * act_dim, :B].T
    return mean, log_std


def init_actor_params(key, obs_dim, act_dim, hidden_dim, param_dtype=jnp.bfloat16):
    """nn.Linear-style init (uniform +-1/sqrt(fan_in)).

    w1/w2 are stored (in, out) — transpose of PyTorch's (out, in).  The mean /
    log_std heads are fused and stored *transposed* as whT of shape
    (HEAD_ROWS, hidden): mean weights in rows [0, act_dim), log_std weights in
    rows [act_dim, 2*act_dim), remaining rows zero (sublane padding to 8).
    """
    def linear(k, fan_in, fan_out):
        kw, kb = jax.random.split(k)
        bound = 1.0 / math.sqrt(fan_in)
        w = jax.random.uniform(kw, (fan_in, fan_out), jnp.float32, -bound, bound)
        b = jax.random.uniform(kb, (1, fan_out), jnp.float32, -bound, bound)
        return w, b

    head_rows = max(8, _round_up(2 * act_dim, 8))
    k1, k2, k3, k4 = jax.random.split(key, 4)
    w1, b1 = linear(k1, obs_dim, hidden_dim)
    w2, b2 = linear(k2, hidden_dim, hidden_dim)
    wm, bm = linear(k3, hidden_dim, act_dim)
    ws, bs = linear(k4, hidden_dim, act_dim)

    whT = jnp.zeros((head_rows, hidden_dim), jnp.float32)
    whT = whT.at[:act_dim].set(wm.T).at[act_dim:2 * act_dim].set(ws.T)
    bhT = jnp.zeros((head_rows, 1), jnp.float32)
    bhT = bhT.at[:act_dim, 0].set(bm[0]).at[act_dim:2 * act_dim, 0].set(bs[0])

    return dict(
        w1=w1.astype(param_dtype), b1=b1,
        w2=w2.astype(param_dtype), b2=b2,
        whT=whT.astype(param_dtype), bhT=bhT,
    )


def actor_forward_ref(x, params, act_dim, *, gelu_dtype=None):
    """Pure-JAX reference with identical dtype handling (bf16 MXU, f32 accum)."""
    if gelu_dtype is None:
        gelu_dtype = _default_gelu_dtype()
    cdt = params["w1"].dtype
    h1 = jnp.dot(x.astype(cdt), params["w1"],
                 preferred_element_type=jnp.float32) + params["b1"]
    h1 = _gelu_tanh(h1.astype(gelu_dtype)).astype(cdt)
    h2 = jnp.dot(h1, params["w2"],
                 preferred_element_type=jnp.float32) + params["b2"]
    h2 = _gelu_tanh(h2.astype(gelu_dtype)).astype(cdt)
    headT = jnp.einsum("rh,bh->rb", params["whT"], h2,
                       preferred_element_type=jnp.float32) + params["bhT"]
    mean = headT[:act_dim].T
    log_std = jnp.clip(headT[act_dim:2 * act_dim], LOG_STD_MIN, LOG_STD_MAX).T
    return mean, log_std


if __name__ == "__main__":
    # LunarLanderContinuous-v2: obs_dim=8, act_dim=2. Small hidden for the test.
    batch, obs_dim, act_dim, hidden_dim = 4, 8, 2, 32

    key = jax.random.PRNGKey(0)
    kx, kp = jax.random.split(key)
    x = jax.random.normal(kx, (batch, obs_dim), dtype=jnp.float32)
    params = init_actor_params(kp, obs_dim, act_dim, hidden_dim)

    gelu_dtype = _default_gelu_dtype()
    mean, log_std = actor_forward(x, params, act_dim, gelu_dtype=gelu_dtype)
    jax.block_until_ready((mean, log_std))

    mean_ref, log_std_ref = actor_forward_ref(x, params, act_dim,
                                              gelu_dtype=gelu_dtype)
    tol = 2e-2 if gelu_dtype == jnp.bfloat16 else 1e-3
    assert mean.shape == (batch, act_dim) and log_std.shape == (batch, act_dim)
    assert jnp.allclose(mean, mean_ref, atol=tol, rtol=tol)
    assert jnp.allclose(log_std, log_std_ref, atol=tol, rtol=tol)
    assert bool(jnp.all(log_std >= LOG_STD_MIN)) and bool(jnp.all(log_std <= LOG_STD_MAX))

    print("KERNEL_OK")
</pallas_src>

<mosaic_0001>
module attributes {stable_mosaic.version = 11 : i64} {
  func.func @_actor_kernel(%arg0: i32, %arg1: memref<8x8xf32, #tpu.memory_space<vmem>>, %arg2: memref<8x32xbf16, #tpu.memory_space<vmem>>, %arg3: memref<1x32xf32, #tpu.memory_space<vmem>>, %arg4: memref<32x32xbf16, #tpu.memory_space<vmem>>, %arg5: memref<1x32xf32, #tpu.memory_space<vmem>>, %arg6: memref<8x32xbf16, #tpu.memory_space<vmem>>, %arg7: memref<8x1xf32, #tpu.memory_space<vmem>>, %arg8: memref<8x8xf32, #tpu.memory_space<vmem>>) attributes {dimension_semantics = [#tpu.dimension_semantics<parallel>], iteration_bounds = array<i64: 1>, scalar_prefetch = 0 : i64, scratch_operands = 0 : i64, tpu.core_type = #tpu.core_type<tc>, window_params = [{transform_indices = @transform_0, window_bounds = array<i64: 8, 8>}, {pipeline_mode = #tpu.pipeline_mode<synchronous>, transform_indices = @transform_1, window_bounds = array<i64: 8, 32>}, {pipeline_mode = #tpu.pipeline_mode<synchronous>, transform_indices = @transform_2, window_bounds = array<i64: 1, 32>}, {pipeline_mode = #tpu.pipeline_mode<synchronous>, transform_indices = @transform_3, window_bounds = array<i64: 32, 32>}, {pipeline_mode = #tpu.pipeline_mode<synchronous>, transform_indices = @transform_4, window_bounds = array<i64: 1, 32>}, {pipeline_mode = #tpu.pipeline_mode<synchronous>, transform_indices = @transform_5, window_bounds = array<i64: 8, 32>}, {pipeline_mode = #tpu.pipeline_mode<synchronous>, transform_indices = @transform_6, window_bounds = array<i64: 8, 1>}, {transform_indices = @transform_7, window_bounds = array<i64: 8, 8>}]} {
    %c0 = arith.constant 0 : index
    %c0_0 = arith.constant 0 : index
    %0 = vector.load %arg1[%c0, %c0_0] : memref<8x8xf32, #tpu.memory_space<vmem>>, vector<8x8xf32>
    %1 = arith.truncf %0 : vector<8x8xf32> to vector<8x8xbf16>
    %c0_1 = arith.constant 0 : index
    %c0_2 = arith.constant 0 : index
    %2 = vector.load %arg3[%c0_1, %c0_2] : memref<1x32xf32, #tpu.memory_space<vmem>>, vector<1x32xf32>
    %c0_3 = arith.constant 0 : index
    %c0_4 = arith.constant 0 : index
    %3 = vector.load %arg5[%c0_3, %c0_4] : memref<1x32xf32, #tpu.memory_space<vmem>>, vector<1x32xf32>
    %c0_5 = arith.constant 0 : index
    %c0_6 = arith.constant 0 : index
    %4 = vector.load %arg7[%c0_5, %c0_6] : memref<8x1xf32, #tpu.memory_space<vmem>>, vector<8x1xf32>
    %c0_7 = arith.constant 0 : index
    %c0_8 = arith.constant 0 : index
    %5 = vector.load %arg2[%c0_7, %c0_8] : memref<8x32xbf16, #tpu.memory_space<vmem>>, vector<8x32xbf16>
    %cst = arith.constant dense<0.000000e+00> : vector<8x32xf32>
    %6 = tpu.matmul %1, %5, %cst {dimension_numbers = #tpu.dot_dimension_numbers<[1], [0], [0], [1], [0, 0, 1, 1], [], []>} : vector<8x8xbf16>, vector<8x32xbf16>, vector<8x32xf32> -> vector<8x32xf32>
    %7 = vector.broadcast %2 : vector<1x32xf32> to vector<8x32xf32>
    %8 = arith.addf %6, %7 : vector<8x32xf32>
    %cst_9 = arith.constant 5.000000e-01 : f32
    %9 = vector.broadcast %cst_9 : f32 to vector<8x32xf32>
    %10 = arith.mulf %9, %8 : vector<8x32xf32>
    %cst_10 = arith.constant 4.471500e-02 : f32
    %11 = vector.broadcast %cst_10 : f32 to vector<8x32xf32>
    %12 = arith.mulf %11, %8 : vector<8x32xf32>
    %13 = arith.mulf %12, %8 : vector<8x32xf32>
    %14 = arith.mulf %13, %8 : vector<8x32xf32>
    %15 = arith.addf %8, %14 : vector<8x32xf32>
    %cst_11 = arith.constant 0.797884583 : f32
    %16 = vector.broadcast %cst_11 : f32 to vector<8x32xf32>
    %17 = arith.mulf %16, %15 : vector<8x32xf32>
    %18 = math.tanh %17 : vector<8x32xf32>
    %cst_12 = arith.constant 1.000000e+00 : f32
    %19 = vector.broadcast %cst_12 : f32 to vector<8x32xf32>
    %20 = arith.addf %19, %18 : vector<8x32xf32>
    %21 = arith.mulf %10, %20 : vector<8x32xf32>
    %22 = arith.truncf %21 : vector<8x32xf32> to vector<8x32xbf16>
    %c0_13 = arith.constant 0 : index
    %c0_14 = arith.constant 0 : index
    %23 = vector.load %arg4[%c0_13, %c0_14] : memref<32x32xbf16, #tpu.memory_space<vmem>>, vector<32x32xbf16>
    %cst_15 = arith.constant dense<0.000000e+00> : vector<8x32xf32>
    %24 = tpu.matmul %22, %23, %cst_15 {dimension_numbers = #tpu.dot_dimension_numbers<[1], [0], [0], [1], [0, 0, 1, 1], [], []>} : vector<8x32xbf16>, vector<32x32xbf16>, vector<8x32xf32> -> vector<8x32xf32>
    %25 = vector.broadcast %3 : vector<1x32xf32> to vector<8x32xf32>
    %26 = arith.addf %24, %25 : vector<8x32xf32>
    %cst_16 = arith.constant 5.000000e-01 : f32
    %27 = vector.broadcast %cst_16 : f32 to vector<8x32xf32>
    %28 = arith.mulf %27, %26 : vector<8x32xf32>
    %cst_17 = arith.constant 4.471500e-02 : f32
    %29 = vector.broadcast %cst_17 : f32 to vector<8x32xf32>
    %30 = arith.mulf %29, %26 : vector<8x32xf32>
    %31 = arith.mulf %30, %26 : vector<8x32xf32>
    %32 = arith.mulf %31, %26 : vector<8x32xf32>
    %33 = arith.addf %26, %32 : vector<8x32xf32>
    %cst_18 = arith.constant 0.797884583 : f32
    %34 = vector.broadcast %cst_18 : f32 to vector<8x32xf32>
    %35 = arith.mulf %34, %33 : vector<8x32xf32>
    %36 = math.tanh %35 : vector<8x32xf32>
    %cst_19 = arith.constant 1.000000e+00 : f32
    %37 = vector.broadcast %cst_19 : f32 to vector<8x32xf32>
    %38 = arith.addf %37, %36 : vector<8x32xf32>
    %39 = arith.mulf %28, %38 : vector<8x32xf32>
    %40 = arith.truncf %39 : vector<8x32xf32> to vector<8x32xbf16>
    %c0_20 = arith.constant 0 : index
    %c0_21 = arith.constant 0 : index
    %41 = vector.load %arg6[%c0_20, %c0_21] : memref<8x32xbf16, #tpu.memory_space<vmem>>, vector<8x32xbf16>
    "tpu.trace_start"() <{level = 10 : i32, message = "rh,bh->rb"}> : () -> ()
    %cst_22 = arith.constant dense<0.000000e+00> : vector<8x8xf32>
    %42 = tpu.matmul %41, %40, %cst_22 {dimension_numbers = #tpu.dot_dimension_numbers<[1], [1], [0], [0], [0, 0, 1, 0], [], []>} : vector<8x32xbf16>, vector<8x32xbf16>, vector<8x8xf32> -> vector<8x8xf32>
    "tpu.trace_stop"() : () -> ()
    %43 = vector.broadcast %4 : vector<8x1xf32> to vector<8x8xf32>
    %44 = arith.addf %42, %43 : vector<8x8xf32>
    %45 = tpu.iota {dimensions = array<i32: 0>} : vector<8x1xi32>
    %cst_23 = arith.constant -2.000000e+01 : f32
    %cst_24 = arith.constant 2.000000e+00 : f32
    %46 = vector.broadcast %cst_23 : f32 to vector<8x8xf32>
    %47 = arith.maximumf %46, %44 : vector<8x8xf32>
    %48 = vector.broadcast %cst_24 : f32 to vector<8x8xf32>
    %49 = arith.minimumf %48, %47 : vector<8x8xf32>
    %c2_i32 = arith.constant 2 : i32
    %50 = vector.broadcast %c2_i32 : i32 to vector<8x1xi32>
    %51 = arith.cmpi sge, %45, %50 : vector<8x1xi32>
    %52 = vector.shape_cast %51 : vector<8x1xi1> to vector<8x1xi1>
    %53 = vector.broadcast %52 : vector<8x1xi1> to vector<8x8xi1>
    %54 = arith.select %53, %49, %44 : vector<8x8xi1>, vector<8x8xf32>
    %c0_25 = arith.constant 0 : index
    %c0_26 = arith.constant 0 : index
    %55 = vector.load %arg8[%c0_25, %c0_26] : memref<8x8xf32, #tpu.memory_space<vmem>>, vector<8x8xf32>
    tpu.vector_store %arg8[%c0_25, %c0_26], %54 {strides = array<i32>} : memref<8x8xf32, #tpu.memory_space<vmem>>, vector<8x8xf32>,
    return
  }
  func.func @transform_0(%arg0: i32) -> (i32, i32) {
    %c0_i32 = arith.constant 0 : i32
    %c0_i32_0 = arith.constant 0 : i32
    return %arg0, %c0_i32 : i32, i32
  }
  func.func @transform_1(%arg0: i32) -> (i32, i32) {
    %c0_i32 = arith.constant 0 : i32
    %c0_i32_0 = arith.constant 0 : i32
    %c0_i32_1 = arith.constant 0 : i32
    return %c0_i32, %c0_i32_0 : i32, i32
  }
  func.func @transform_2(%arg0: i32) -> (i32, i32) {
    %c0_i32 = arith.constant 0 : i32
    %c0_i32_0 = arith.constant 0 : i32
    %c0_i32_1 = arith.constant 0 : i32
    return %c0_i32, %c0_i32_0 : i32, i32
  }
  func.func @transform_3(%arg0: i32) -> (i32, i32) {
    %c0_i32 = arith.constant 0 : i32
    %c0_i32_0 = arith.constant 0 : i32
    %c0_i32_1 = arith.constant 0 : i32
    return %c0_i32, %c0_i32_0 : i32, i32
  }
  func.func @transform_4(%arg0: i32) -> (i32, i32) {
    %c0_i32 = arith.constant 0 : i32
    %c0_i32_0 = arith.constant 0 : i32
    %c0_i32_1 = arith.constant 0 : i32
    return %c0_i32, %c0_i32_0 : i32, i32
  }
  func.func @transform_5(%arg0: i32) -> (i32, i32) {
    %c0_i32 = arith.constant 0 : i32
    %c0_i32_0 = arith.constant 0 : i32
    %c0_i32_1 = arith.constant 0 : i32
    return %c0_i32, %c0_i32_0 : i32, i32
  }
  func.func @transform_6(%arg0: i32) -> (i32, i32) {
    %c0_i32 = arith.constant 0 : i32
    %c0_i32_0 = arith.constant 0 : i32
    %c0_i32_1 = arith.constant 0 : i32
    return %c0_i32, %c0_i32_0 : i32, i32
  }
  func.func @transform_7(%arg0: i32) -> (i32, i32) {
    %c0_i32 = arith.constant 0 : i32
    %c0_i32_0 = arith.constant 0 : i32
    return %c0_i32, %arg0 : i32, i32
  }
}

</mosaic_0001>

<llo_original>
// kernel: tpu_custom_call.1
$region0: #{tpu_custom_call.1}
  #allocation0 [shape = 'u32[]', space=smem, size = 0x4, offset = 0x4, fixed_abs, tag = 'smem constant byte address 0x4 - core index']
  #allocation1 [shape = 'u32[72,128]{1,0:T(1,128)}', space=vmem, size = 0x9000, scoped, tag = 'internal scratch']
  %s0 = inlined_call_operand.vmem [shape: f32[8,8], index: 0, kind: input, shape index: {}]
  %s1 = inlined_call_operand.hbm [shape: bf16[8,32], index: 1, kind: input, shape index: {}]
  %s2 = inlined_call_operand.vmem [shape: f32[1,32], index: 2, kind: input, shape index: {}]
  %s3 = inlined_call_operand.hbm [shape: bf16[32,32], index: 3, kind: input, shape index: {}]
  %s4 = inlined_call_operand.vmem [shape: f32[1,32], index: 4, kind: input, shape index: {}]
  %s5 = inlined_call_operand.hbm [shape: bf16[8,32], index: 5, kind: input, shape index: {}]
  %s6 = inlined_call_operand.vmem [shape: f32[8,1], index: 6, kind: input, shape index: {}]
  %s7 = inlined_call_operand.hbm [shape: f32[8,8], index: 7, kind: output, shape index: {}]
  %s8 = sld [smem:[#allocation0]]
  $region50: #{tpu_custom_call.1} parent=0
    _
  %s10 = ssub.s32 1, %s8
  %s11 = scalar_select 0, %s10, %s8
  $region1: #{tpu_custom_call.1} parent=0
    #allocation2 [shape = 'u8[2048]{0}', space=vmem, size = 0x800, scoped, tag = 'input window, operand 1, single buffered']
    #allocation3 [shape = 's32[1]{0}', space=sflag, size = 0x4, scoped, tag = 'scoped memory for tpu_custom_call.1']
    #allocation4 [shape = 's32[1]{0}', space=sflag, size = 0x4, scoped, tag = 'scoped memory for tpu_custom_call.1']
    #allocation5 [shape = 'u8[8192]{0}', space=vmem, size = 0x2000, scoped, tag = 'input window, operand 3, single buffered']
    #allocation6 [shape = 's32[1]{0}', space=sflag, size = 0x4, scoped, tag = 'scoped memory for tpu_custom_call.1']
    #allocation7 [shape = 'u8[2048]{0}', space=vmem, size = 0x800, scoped, tag = 'input window, operand 5, single buffered']
    #allocation8 [shape = 'u8[4096]{0}', space=vmem, size = 0x1000, scoped, tag = 'output window, operand 0, single buffered']
    %12 = vsyncpa [#allocation3], 0
    %13 = vsyncpa [#allocation6], 0
    %14 = vsyncpa [#allocation4], 0
    // Predicated region
    $region2: #{tpu_custom_call.1} parent=1 // pred_check
      _
    $region3: #{tpu_custom_call.1} parent=1 // pred_check_branch
      %16 = sbr.rel (0) target = $region5
    $region4: #{tpu_custom_call.1} parent=1 // pred_region
      _
    $region5: #{tpu_custom_call.1} parent=1 // pred_fallthru
      _
    // Predicated region
    $region6: #{tpu_custom_call.1} parent=1 // pred_check
      _
    $region7: #{tpu_custom_call.1} parent=1 // pred_check_branch
      %18 = sbr.rel (0) target = $region9
    $region8: #{tpu_custom_call.1} parent=1 // pred_region
      %20 = vsyncadd [#allocation3], 0
      %s22 = sshll.u32 %s1, 4
      %s23 = int_to_ptr.hbm [resolvable:$true] %s22
      %s24 = sshll.u32 [#allocation2], 4
      %s25 = int_to_ptr.vmem [resolvable:$true] %s24
      %27 = dma.hbm_to_vmem [thread:$0]  %s23, 64, %s25, [#allocation3]
    $region9: #{tpu_custom_call.1} parent=1 // pred_fallthru
      _
    // Predicated region
    $region10: #{tpu_custom_call.1} parent=1 // pred_check
      _
    $region11: #{tpu_custom_call.1} parent=1 // pred_check_branch
      %29 = sbr.rel (0) target = $region13
    $region12: #{tpu_custom_call.1} parent=1 // pred_region
      _
    $region13: #{tpu_custom_call.1} parent=1 // pred_fallthru
      _
    // Predicated region
    $region14: #{tpu_custom_call.1} parent=1 // pred_check
      _
    $region15: #{tpu_custom_call.1} parent=1 // pred_check_branch
      %31 = sbr.rel (0) target = $region17
    $region16: #{tpu_custom_call.1} parent=1 // pred_region
      %33 = vsyncadd [#allocation6], 0
      %s34 = sshll.u32 %s3, 4
      %s35 = int_to_ptr.hbm [resolvable:$true] %s34
      %s36 = sshll.u32 [#allocation5], 4
      %s37 = int_to_ptr.vmem [resolvable:$true] %s36
      %42 = dma.hbm_to_vmem [thread:$0]  %s35, 256, %s37, [#allocation6], 64, 64, 4
    $region17: #{tpu_custom_call.1} parent=1 // pred_fallthru
      _
    // Predicated region
    $region18: #{tpu_custom_call.1} parent=1 // pred_check
      _
    $region19: #{tpu_custom_call.1} parent=1 // pred_check_branch
      %44 = sbr.rel (0) target = $region21
    $region20: #{tpu_custom_call.1} parent=1 // pred_region
      _
    $region21: #{tpu_custom_call.1} parent=1 // pred_fallthru
      _
    // Predicated region
    $region22: #{tpu_custom_call.1} parent=1 // pred_check
      _
    $region23: #{tpu_custom_call.1} parent=1 // pred_check_branch
      %46 = sbr.rel (0) target = $region25
    $region24: #{tpu_custom_call.1} parent=1 // pred_region
      %48 = vsyncadd [#allocation6], 0
      %s50 = sshll.u32 %s5, 4
      %s51 = int_to_ptr.hbm [resolvable:$true] %s50
      %s52 = sshll.u32 [#allocation7], 4
      %s53 = int_to_ptr.vmem [resolvable:$true] %s52
      %55 = dma.hbm_to_vmem [thread:$0]  %s51, 64, %s53, [#allocation6]
    $region25: #{tpu_custom_call.1} parent=1 // pred_fallthru
      _
    // Predicated region
    $region26: #{tpu_custom_call.1} parent=1 // pred_check
      _
    $region27: #{tpu_custom_call.1} parent=1 // pred_check_branch
      %57 = sbr.rel (0) target = $region29
    $region28: #{tpu_custom_call.1} parent=1 // pred_region
      _
    $region29: #{tpu_custom_call.1} parent=1 // pred_fallthru
      _
    // Predicated region
    $region30: #{tpu_custom_call.1} parent=1 // pred_check
      _
    $region31: #{tpu_custom_call.1} parent=1 // pred_check_branch
      %59 = sbr.rel (0) target = $region33
    $region32: #{tpu_custom_call.1} parent=1 // pred_region
      %61 = dma.done [#allocation3], 64
    $region33: #{tpu_custom_call.1} parent=1 // pred_fallthru
      _
    // Predicated region
    $region34: #{tpu_custom_call.1} parent=1 // pred_check
      _
    $region35: #{tpu_custom_call.1} parent=1 // pred_check_branch
      %63 = sbr.rel (0) target = $region37
    $region36: #{tpu_custom_call.1} parent=1 // pred_region
      %65 = dma.done [#allocation6], 256
    $region37: #{tpu_custom_call.1} parent=1 // pred_fallthru
      _
    // Predicated region
    $region38: #{tpu_custom_call.1} parent=1 // pred_check
      _
    $region39: #{tpu_custom_call.1} parent=1 // pred_check_branch
      %67 = sbr.rel (0) target = $region41
    $region40: #{tpu_custom_call.1} parent=1 // pred_region
      %69 = dma.done [#allocation6], 64
    $region41: #{tpu_custom_call.1} parent=1 // pred_fallthru
      _
    %v71 = vld [vmem:[%s0] sm:$0xff]
    %v72 = vpack.c.bf16 %v71, %v71
    %v73 = vld [vmem:[%s2] sm:$0x1]
    %v74 = vld [vmem:[%s4] sm:$0x1]
    %v75 = vld [vmem:[%s6] sm:$0xff]
    %v76 = vld [vmem:[#allocation2] sm:$0xf]
    %v78 = vperm.slane %v73, 0
    %vm80 = vcmask 64512
    %v82 = vsel %vm80, %v72, 0
    %vm84 = vcmask 1043456
    %v86 = vsel %vm84, %v76, 0
    %88 = vmatpush.bf16.msra.mxu0 0
    %89 = vmatpush.bf16.msra.mxu0 0
    %90 = vmatpush.bf16.msra.mxu0 0
    %91 = vmatpush.bf16.msra.mxu0 0
    %92 = vmatpush.bf16.msra.mxu0 0
    %93 = vmatpush.bf16.msra.mxu0 0
    %94 = vmatpush.bf16.msra.mxu0 0
    %95 = vmatpush.bf16.msra.mxu0 %v86
    %96 = vmatmul.bf16.gmra.mxu0 %v82
    %v97 = vpop.f32.mrf.mxu0
    %v98 = vadd.f32 %v78, %v97
    %v99 = vpop.f32.mrf.mxu0
    %100 = vdwg.mxu0
    %v101 = vmul.f32 %v98, 0.5
    %v102 = vmul.f32 %v98, 0.044715
    %v103 = vmul.f32 %v102, %v98
    %v104 = vmul.f32 %v103, %v98
    %v105 = vadd.f32 %v98, %v104
    %v106 = vmul.f32 %v105, 0.7978846
    %v107 = vtanh.pop %v106
    %v108 = vadd.f32 %v107, 1.0
    %v109 = vmul.f32 %v101, %v108
    %v110 = vpack.c.bf16 %v109, %v109
    %v111 = vld [vmem:[#allocation5] sm:$0xf]
    %v112 = vld [vmem:[#allocation5 + $0x4] sm:$0xf]
    %v113 = vld [vmem:[#allocation5 + $0x8] sm:$0xf]
    %v114 = vld [vmem:[#allocation5 + $0xc] sm:$0xf]
    %v116 = vperm.slane %v74, 0
    %v122 = vunpack.c.l.b16 %v111
    %v123 = vunpack.c.l.b16 %v112
    %v124 = vunpack.c.l.b16 %v113
    %v125 = vunpack.c.l.b16 %v114
    %v126 = vpack.c.b16 %v123, %v122
    %v127 = vpack.c.b16 %v125, %v124
    %vm130 = vcmask 261120
    %v132 = vsel %vm130, %v110, 0
    %134 = vmatpush.bf16.msra.mxu0 0
    %135 = vmatpush.bf16.msra.mxu0 0
    %136 = vmatpush.bf16.msra.mxu0 0
    %137 = vmatpush.bf16.msra.mxu0 0
    %138 = vmatpush.bf16.msra.mxu0 0
    %139 = vmatpush.bf16.msra.mxu0 0
    %140 = vmatpush.bf16.msra.mxu0 %v127
    %141 = vmatpush.bf16.msra.mxu0 %v126
    %142 = vmatmul.bf16.gmra.mxu0 %v132
    %v143 = vpop.f32.mrf.mxu0
    %v144 = vadd.f32 %v116, %v143
    %v145 = vpop.f32.mrf.mxu0
    %146 = vdwg.mxu0
    %v147 = vmul.f32 %v144, 0.5
    %v148 = vmul.f32 %v144, 0.044715
    %v149 = vmul.f32 %v148, %v144
    %v150 = vmul.f32 %v149, %v144
    %v151 = vadd.f32 %v144, %v150
    %v152 = vmul.f32 %v151, 0.7978846
    %v153 = vtanh.pop %v152
    %v154 = vadd.f32 %v153, 1.0
    %v155 = vmul.f32 %v147, %v154
    %v156 = vpack.c.bf16 %v155, %v155
    %v157 = vld [vmem:[#allocation7] sm:$0xf]
    %159 = vset.pattern.permute.xlu0 0
    %160 = vperm.xlu0 %159, %v75
    %v161 = vpop.permute.xlu0 %160
    %v164 = vsel %vm130, %v157, 0
    %v167 = vsel %vm130, %v156, 0
    %169 = vmatpush.bf16.xpose.msra.mxu0 0
    %170 = vmatpush.bf16.xpose.msra.mxu0 0
    %171 = vmatpush.bf16.xpose.msra.mxu0 0
    %172 = vmatpush.bf16.xpose.msra.mxu0 0
    %173 = vmatpush.bf16.xpose.msra.mxu0 0
    %174 = vmatpush.bf16.xpose.msra.mxu0 0
    %175 = vmatpush.bf16.xpose.msra.mxu0 0
    %176 = vmatpush.bf16.xpose.msra.mxu0 %v167
    %177 = vmatmul.bf16.gmra.mxu0 %v164
    %v178 = vpop.f32.mrf.mxu0
    %v179 = vadd.f32 %v161, %v178
    %v180 = vpop.f32.mrf.mxu0
    %181 = vdwg.mxu0
    %v182 = vlaneseq
    %v183 = vshrl.u32 %v182, 7
    %v184 = vmax.f32 %v179, -20.0
    %v185 = vmin.f32 %v184, 2.0
    %vm186 = vcmp.ge.s32.totalorder %v183, 2
    %v187 = vsel %vm186, 1, 0
    %vm188 = vcmp.eq.s32.totalorder %v187, 1
    %v189 = vsel %vm188, %v185, %v179
    %190 = vst.msk [vmem:[#allocation8] sm:$0xff] %vm80, %v189
    // Predicated region
    $region42: #{tpu_custom_call.1} parent=1 // pred_check
      _
    $region43: #{tpu_custom_call.1} parent=1 // pred_check_branch
      %192 = sbr.rel (0) target = $region45
    $region44: #{tpu_custom_call.1} parent=1 // pred_region
      %194 = vsyncadd [#allocation4], 0
      %s196 = sshll.u32 [#allocation8], 4
      %s197 = int_to_ptr.vmem [resolvable:$true] %s196
      %s198 = sshll.u32 %s7, 4
      %s199 = int_to_ptr.hbm [resolvable:$true] %s198
      %201 = dma.vmem_to_hbm [thread:$0]  %s197, 128, %s199, [#allocation4]
    $region45: #{tpu_custom_call.1} parent=1 // pred_fallthru
      _
    // Predicated region
    $region46: #{tpu_custom_call.1} parent=1 // pred_check
      _
    $region47: #{tpu_custom_call.1} parent=1 // pred_check_branch
      %203 = sbr.rel (0) target = $region49
    $region48: #{tpu_custom_call.1} parent=1 // pred_region
      %205 = dma.done [#allocation4], 128
    $region49: #{tpu_custom_call.1} parent=1 // pred_fallthru
      _
    %206 = vsyncpa [#allocation3], 1
    %207 = vsyncpa [#allocation6], 1
    %208 = vsyncpa [#allocation4], 1

</llo_original>
